<compile_context>
chip_gen: v6e
topology: v6e:2x2x1
jax: 0.10.0
libtpu: 0.0.40
codegen_flags: <defaults>
</compile_context>

<pallas_src>
import jax
import jax.numpy as jnp
from jax.experimental import pallas as pl
from jax.experimental.pallas import tpu as pltpu


def _pos_encoding_kernel(pos_ref, out_ref):
    # pos_ref: (TILE_S, 1, D) rows of the positional table for this tile
    #          (selected entirely by the BlockSpec index_map).
    # out_ref: (TILE_S, N, D); out[s, n, :] = pos_ref[s, 0, :] for every n
    #          (pure sublane broadcast on the VPU).
    out_ref[...] = jnp.broadcast_to(pos_ref[...], out_ref.shape)


def _pick_tile_s(S, N, D, itemsize):
    """Sequence tile: multiple of 8, <=512, out-block <= ~4 MiB, <= ceil8(S)."""
    budget = 4 * 1024 * 1024  # bytes per output block buffer (double-buffered)
    t = budget // max(1, N * D * itemsize)
    t = max(8, min(512, (t // 8) * 8))
    s_ceil8 = pl.cdiv(S, 8) * 8
    return min(t, s_ceil8)


def positional_encoding(x, pos_weight):
    """x: (S, N) (only its shape is used).  Returns (S, N, D) with out[s,n,:]=W[s,:]."""
    S, N = x.shape
    max_len, D = pos_weight.shape
    if S > max_len:
        # torch.nn.Embedding would raise an index error here as well.
        raise ValueError(f"sequence length {S} exceeds max_len {max_len}")

    itemsize = jnp.dtype(pos_weight.dtype).itemsize
    tile_s = _pick_tile_s(S, N, D, itemsize)

    # Free metadata reshape: an explicit unit "N" axis lets the kernel do a
    # plain sublane broadcast with no in-kernel reshape.
    table = pos_weight.reshape(max_len, 1, D)

    return pl.pallas_call(
        _pos_encoding_kernel,
        out_shape=jax.ShapeDtypeStruct((S, N, D), pos_weight.dtype),
        grid=(pl.cdiv(S, tile_s),),
        in_specs=[pl.BlockSpec((tile_s, 1, D), lambda i: (i, 0, 0))],
        out_specs=pl.BlockSpec((tile_s, N, D), lambda i: (i, 0, 0)),
        compiler_params=pltpu.CompilerParams(
            dimension_semantics=("parallel",)),
    )(table)


positional_encoding_jit = jax.jit(positional_encoding)


def _reference(x, pos_weight):
    S, N = x.shape
    D = pos_weight.shape[1]
    return jnp.broadcast_to(pos_weight[:S][:, None, :], (S, N, D))


if __name__ == "__main__":
    D_MODEL, MAX_LEN = 32, 64
    key = jax.random.PRNGKey(0)
    kw, kx1, kx2, kx3 = jax.random.split(key, 4)

    # nn.Embedding default init ~ N(0, 1)
    pos_weight = jax.random.normal(kw, (MAX_LEN, D_MODEL), jnp.float32)

    # Case 1: seq=8, batch=2 (single-tile grid).
    S1, N1 = 8, 2
    x1 = jax.random.randint(kx1, (S1, N1), 0, 100, dtype=jnp.int32)  # values unused
    out1 = jax.block_until_ready(positional_encoding_jit(x1, pos_weight))
    ref1 = _reference(x1, pos_weight)
    assert out1.shape == (S1, N1, D_MODEL), out1.shape
    assert jnp.allclose(out1, ref1), float(jnp.max(jnp.abs(out1 - ref1)))

    # Case 2: seq=40, batch=3 (multi-block shapes, divisible by 8).
    S2, N2 = 40, 3
    x2 = jax.random.randint(kx2, (S2, N2), 0, 100, dtype=jnp.int32)
    out2 = jax.block_until_ready(positional_encoding_jit(x2, pos_weight))
    ref2 = _reference(x2, pos_weight)
    assert out2.shape == (S2, N2, D_MODEL), out2.shape
    assert jnp.allclose(out2, ref2), float(jnp.max(jnp.abs(out2 - ref2)))

    # Case 3: seq=13, batch=2 (non-multiple-of-8 -> boundary-block masking).
    S3, N3 = 13, 2
    x3 = jax.random.randint(kx3, (S3, N3), 0, 100, dtype=jnp.int32)
    out3 = jax.block_until_ready(positional_encoding_jit(x3, pos_weight))
    ref3 = _reference(x3, pos_weight)
    assert out3.shape == (S3, N3, D_MODEL), out3.shape
    assert jnp.allclose(out3, ref3), float(jnp.max(jnp.abs(out3 - ref3)))

    print("KERNEL_OK")
</pallas_src>

<mosaic_0001>
module attributes {stable_mosaic.version = 11 : i64} {
  func.func @_pos_encoding_kernel(%arg0: i32, %arg1: memref<8x1x32xf32, #tpu.memory_space<vmem>>, %arg2: memref<8x2x32xf32, #tpu.memory_space<vmem>>) attributes {dimension_semantics = [#tpu.dimension_semantics<parallel>], iteration_bounds = array<i64: 1>, scalar_prefetch = 0 : i64, scratch_operands = 0 : i64, tpu.core_type = #tpu.core_type<tc>, window_params = [{transform_indices = @transform_0, window_bounds = array<i64: 8, 1, 32>}, {transform_indices = @transform_1, window_bounds = array<i64: 8, 2, 32>}]} {
    %c0 = arith.constant 0 : index
    %c0_0 = arith.constant 0 : index
    %c0_1 = arith.constant 0 : index
    %0 = vector.load %arg1[%c0, %c0_0, %c0_1] : memref<8x1x32xf32, #tpu.memory_space<vmem>>, vector<8x1x32xf32>
    %1 = vector.shape_cast %0 : vector<8x1x32xf32> to vector<8x1x32xf32>
    %2 = vector.broadcast %1 : vector<8x1x32xf32> to vector<8x2x32xf32>
    %c0_2 = arith.constant 0 : index
    %c0_3 = arith.constant 0 : index
    %c0_4 = arith.constant 0 : index
    %3 = vector.load %arg2[%c0_2, %c0_3, %c0_4] : memref<8x2x32xf32, #tpu.memory_space<vmem>>, vector<8x2x32xf32>
    tpu.vector_store %arg2[%c0_2, %c0_3, %c0_4], %2 {strides = array<i32>} : memref<8x2x32xf32, #tpu.memory_space<vmem>>, vector<8x2x32xf32>,
    return
  }
  func.func @transform_0(%arg0: i32) -> (i32, i32, i32) {
    %c0_i32 = arith.constant 0 : i32
    %c0_i32_0 = arith.constant 0 : i32
    %c0_i32_1 = arith.constant 0 : i32
    return %arg0, %c0_i32, %c0_i32_0 : i32, i32, i32
  }
  func.func @transform_1(%arg0: i32) -> (i32, i32, i32) {
    %c0_i32 = arith.constant 0 : i32
    %c0_i32_0 = arith.constant 0 : i32
    %c0_i32_1 = arith.constant 0 : i32
    return %arg0, %c0_i32, %c0_i32_0 : i32, i32, i32
  }
}

</mosaic_0001>

<llo_original>
// kernel: positional_encoding.1
$region0: #{positional_encoding.1}
  #allocation0 [shape = 'u32[]', space=smem, size = 0x4, offset = 0x4, fixed_abs, tag = 'smem constant byte address 0x4 - core index']
  #allocation1 [shape = 'u32[144,128]{1,0:T(1,128)}', space=vmem, size = 0x12000, scoped, tag = 'internal scratch']
  %s0 = inlined_call_operand.vmem [shape: f32[64,1,32], index: 0, kind: input, shape index: {}]
  %s1 = inlined_call_operand.hbm [shape: f32[8,2,32], index: 1, kind: output, shape index: {}]
  %s2 = sld [smem:[#allocation0]]
  $region14: #{positional_encoding.1} parent=0
    _
  %s4 = ssub.s32 1, %s2
  %s5 = scalar_select 0, %s4, %s2
  $region1: #{positional_encoding.1} parent=0
    #allocation2 [shape = 'u8[8192]{0}', space=vmem, size = 0x2000, scoped, tag = 'output window, operand 0, single buffered']
    #allocation3 [shape = 's32[1]{0}', space=sflag, size = 0x4, scoped, tag = 'scoped memory for positional_encoding.1']
    %6 = vsyncpa [#allocation3], 0
    // Predicated region
    $region2: #{positional_encoding.1} parent=1 // pred_check
      _
    $region3: #{positional_encoding.1} parent=1 // pred_check_branch
      %8 = sbr.rel (0) target = $region5
    $region4: #{positional_encoding.1} parent=1 // pred_region
      _
    $region5: #{positional_encoding.1} parent=1 // pred_fallthru
      _
    %v9 = vld [vmem:[%s0] sm:$0x1]
    %v10 = vld [vmem:[%s0 + $0x1] sm:$0x1]
    %v11 = vld [vmem:[%s0 + $0x2] sm:$0x1]
    %v12 = vld [vmem:[%s0 + $0x3] sm:$0x1]
    %v13 = vld [vmem:[%s0 + $0x4] sm:$0x1]
    %v14 = vld [vmem:[%s0 + $0x5] sm:$0x1]
    %v15 = vld [vmem:[%s0 + $0x6] sm:$0x1]
    %v16 = vld [vmem:[%s0 + $0x7] sm:$0x1]
    %v25 = vlaneseq
    %v26 = vshrl.u32 %v25, 7
    %v27 = vsub.s32 0, %v26
    %v28 = vrot.slane %v9, %v27
    %v29 = vlaneseq
    %v30 = vshrl.u32 %v29, 7
    %v31 = vsub.s32 0, %v30
    %v32 = vrot.slane %v10, %v31
    %v33 = vlaneseq
    %v34 = vshrl.u32 %v33, 7
    %v35 = vsub.s32 0, %v34
    %v36 = vrot.slane %v11, %v35
    %v37 = vlaneseq
    %v38 = vshrl.u32 %v37, 7
    %v39 = vsub.s32 0, %v38
    %v40 = vrot.slane %v12, %v39
    %v41 = vlaneseq
    %v42 = vshrl.u32 %v41, 7
    %v43 = vsub.s32 0, %v42
    %v44 = vrot.slane %v13, %v43
    %v45 = vlaneseq
    %v46 = vshrl.u32 %v45, 7
    %v47 = vsub.s32 0, %v46
    %v48 = vrot.slane %v14, %v47
    %v49 = vlaneseq
    %v50 = vshrl.u32 %v49, 7
    %v51 = vsub.s32 0, %v50
    %v52 = vrot.slane %v15, %v51
    %v53 = vlaneseq
    %v54 = vshrl.u32 %v53, 7
    %v55 = vsub.s32 0, %v54
    %v56 = vrot.slane %v16, %v55
    %vm65 = vcmask 254976
    %66 = vst.msk [vmem:[#allocation2] sm:$0x3] %vm65, %v28
    %67 = vst.msk [vmem:[#allocation2 + $0x2] sm:$0x3] %vm65, %v32
    %68 = vst.msk [vmem:[#allocation2 + $0x4] sm:$0x3] %vm65, %v36
    %69 = vst.msk [vmem:[#allocation2 + $0x6] sm:$0x3] %vm65, %v40
    %70 = vst.msk [vmem:[#allocation2 + $0x8] sm:$0x3] %vm65, %v44
    %71 = vst.msk [vmem:[#allocation2 + $0xa] sm:$0x3] %vm65, %v48
    %72 = vst.msk [vmem:[#allocation2 + $0xc] sm:$0x3] %vm65, %v52
    %73 = vst.msk [vmem:[#allocation2 + $0xe] sm:$0x3] %vm65, %v56
    // Predicated region
    $region6: #{positional_encoding.1} parent=1 // pred_check
      _
    $region7: #{positional_encoding.1} parent=1 // pred_check_branch
      %75 = sbr.rel (0) target = $region9
    $region8: #{positional_encoding.1} parent=1 // pred_region
      %s77 = ssub.s32 256, 256
      %78 = vsyncadd [#allocation3], %s77
      %s79 = sshll.u32 [#allocation2], 4
      %s80 = int_to_ptr.vmem [resolvable:$true] %s79
      %85 = dma.vmem_to_hbm [thread:$0]  %s80, 256, %s1, [#allocation3], 32, 32, 2
    $region9: #{positional_encoding.1} parent=1 // pred_fallthru
      _
    // Predicated region
    $region10: #{positional_encoding.1} parent=1 // pred_check
      _
    $region11: #{positional_encoding.1} parent=1 // pred_check_branch
      %87 = sbr.rel (0) target = $region13
    $region12: #{positional_encoding.1} parent=1 // pred_region
      %88 = dma.done [#allocation3], 256
    $region13: #{positional_encoding.1} parent=1 // pred_fallthru
      _
    %89 = vsyncpa [#allocation3], 1

</llo_original>
